<compile_context>
chip_gen: v7x
topology: tpu7x:2x2x1
jax: 0.10.0
libtpu: 0.0.40
codegen_flags: <defaults>
</compile_context>

<pallas_src>
import functools
import inspect

import jax
import jax.numpy as jnp
from jax.experimental import pallas as pl
from jax.experimental.pallas import tpu as pltpu

EPS = 1e-5

# One-time capability probe for BlockSpec(pipeline_mode=...). Replaces the old
# broad try/except fallback, which could mask genuine lowering/VMEM errors.
try:
    _HAS_PIPELINE_MODE = (
        "pipeline_mode" in inspect.signature(pl.BlockSpec).parameters)
except (TypeError, ValueError):
    _HAS_PIPELINE_MODE = False


def prenorm_linear_kernel(x_ref, gamma_ref, beta_ref, w_ref, b_ref, o_ref):
    # x_ref: (tile_rows, D)   gamma/beta: (1, D)
    # w_ref: (D, tile_n)      b: (1, tile_n)   o_ref: (tile_rows, tile_n)
    x = x_ref[...].astype(jnp.float32)

    # --- LayerNorm over the last axis (biased variance, eps inside rsqrt,
    # f32 stats — matches torch.nn.LayerNorm). Two-pass variance kept for
    # robustness to large-mean inputs; gamma folded into inv_std to save one
    # tile-sized f32 temporary. ---
    mean = jnp.mean(x, axis=-1, keepdims=True)
    centered = x - mean
    var = jnp.mean(centered * centered, axis=-1, keepdims=True)
    scale = jax.lax.rsqrt(var + EPS) * gamma_ref[...].astype(jnp.float32)
    y = centered * scale + beta_ref[...].astype(jnp.float32)

    # --- fn = Linear(D, D_out): feed the MXU in the weight dtype, accumulate
    # in f32. ---
    out = jnp.dot(y.astype(w_ref.dtype), w_ref[...],
                  preferred_element_type=jnp.float32)
    out = out + b_ref[...].astype(jnp.float32)
    o_ref[...] = out.astype(o_ref.dtype)


def _round_up(x, m):
    return (x + m - 1) // m * m


def _vmem_budget_bytes():
    try:
        cap = int(pltpu.get_tpu_info().vmem_capacity_bytes)
    except Exception:
        cap = 64 * 1024 * 1024            # conservative default (v7x size)
    return cap * 3 // 4                   # headroom for compiler temporaries


def _pick_tiles(rows, D, D_out, x_itemsize, w_itemsize, out_itemsize, budget,
                requested_rows=None, requested_n=None):
    """VMEM-budget-aware (tile_rows, tile_n).

    Column tile: prefer the FULL weight resident (no re-streaming of x per
    column slab); otherwise the largest 128-multiple slab fitting ~2/3 of the
    budget.  Row tile: sized to the remaining budget; bigger tiles amortize
    the ~0.35us/step grid overhead and improve HBM streaming efficiency.
    """
    w_budget = budget * 2 // 3
    if requested_n is not None:
        tile_n = requested_n
    elif D * D_out * w_itemsize <= w_budget:
        tile_n = D_out                                    # whole weight resident
    else:
        tile_n = 128
        for cand in (8192, 4096, 2048, 1024, 512, 256, 128):
            if D * cand * w_itemsize <= w_budget:
                tile_n = cand
                break
    tile_n = min(tile_n, D_out)

    align = 16 if x_itemsize < 4 else 8
    n_w_bufs = 1 if _HAS_PIPELINE_MODE else 2
    remaining = max(budget - D * tile_n * w_itemsize * n_w_bufs, budget // 8)
    # Per-row footprint: double-buffered x + out tiles plus ~4 f32-width-D
    # temporaries from the LN/matmul body (x_f32, centered, y, MXU-cast copy).
    per_row = 2 * D * x_itemsize + 2 * tile_n * out_itemsize + 4 * D * 4

    desired = requested_rows
    if desired is None:
        desired = 512 if D <= 4096 else 256
    fit_rows = max(align, (remaining // per_row) // align * align)
    tile_rows = max(align, min(_round_up(desired, align),
                               fit_rows,
                               _round_up(rows, align)))
    return tile_rows, tile_n


@functools.partial(
    jax.jit,
    static_argnames=("tile_rows", "tile_n", "sb_w", "vmem_limit_bytes"))
def _prenorm_linear_call(x2, gamma2, beta2, w, b2, *, tile_rows, tile_n,
                         sb_w, vmem_limit_bytes):
    rows, D = x2.shape
    D_out = w.shape[1]
    n_tiles = pl.cdiv(D_out, tile_n)
    row_tiles = pl.cdiv(rows, tile_rows)

    def resident(shape, imap, single):
        # Single-buffer slow-changing operands: default double-buffering would
        # allocate a second copy of a (potentially huge) weight slab for no
        # pipelining benefit.
        if single and _HAS_PIPELINE_MODE:
            return pl.BlockSpec(shape, imap, pipeline_mode=pl.Buffered(1))
        return pl.BlockSpec(shape, imap)

    # Grid = (n_tiles, row_tiles): rows iterate fastest, so the w/b column
    # slab stays resident in VMEM while x row tiles stream through.
    in_specs = [
        pl.BlockSpec((tile_rows, D), lambda j, i: (i, 0)),        # x rows
        resident((1, D), lambda j, i: (0, 0), True),              # gamma
        resident((1, D), lambda j, i: (0, 0), True),              # beta
        resident((D, tile_n), lambda j, i: (0, j), sb_w),         # weight slab
        resident((1, tile_n), lambda j, i: (0, j), sb_w),         # bias slab
    ]
    out_specs = pl.BlockSpec((tile_rows, tile_n), lambda j, i: (i, j))

    cost = pl.CostEstimate(
        flops=2 * rows * D * D_out + 8 * rows * D * n_tiles,
        transcendentals=rows * n_tiles,
        bytes_accessed=(n_tiles * rows * D * x2.dtype.itemsize
                        + D * D_out * w.dtype.itemsize
                        + rows * D_out * x2.dtype.itemsize),
    )

    return pl.pallas_call(
        prenorm_linear_kernel,
        out_shape=jax.ShapeDtypeStruct((rows, D_out), x2.dtype),
        grid_spec=pltpu.PrefetchScalarGridSpec(
            num_scalar_prefetch=0,
            grid=(n_tiles, row_tiles),
            in_specs=in_specs,
            out_specs=out_specs,
        ),
        compiler_params=pltpu.CompilerParams(
            dimension_semantics=("parallel", "parallel"),
            vmem_limit_bytes=vmem_limit_bytes),
        cost_estimate=cost,
    )(x2, gamma2, beta2, w, b2)


def prenorm_linear(x, gamma, beta, w, b, *, tile_rows=None, tile_n=None,
                   mxu_dtype=None):
    """x: (B, S, D) -> (B, S, D_out), computing Linear(LayerNorm(x))."""
    B, S, D = x.shape
    D_out = w.shape[1]
    rows = B * S
    x2 = x.reshape(rows, D)            # collapsing leading dims: no copy

    # Optional reduced-precision weight path (full MXU bf16 rate); the kernel
    # keeps f32 accumulation via preferred_element_type.
    if mxu_dtype is not None and w.dtype != mxu_dtype:
        w = w.astype(mxu_dtype)

    budget = _vmem_budget_bytes()
    tr, tn = _pick_tiles(rows, D, D_out,
                         x2.dtype.itemsize, w.dtype.itemsize,
                         x2.dtype.itemsize, budget,
                         requested_rows=tile_rows, requested_n=tile_n)

    n_tiles = pl.cdiv(D_out, tn)
    row_tiles = pl.cdiv(rows, tr)
    # Single-buffer the weight slab only when there are no refills (single
    # slab) or the un-overlapped refill at a column-slab transition is
    # amortized over enough row tiles.
    sb_w = (n_tiles == 1) or (row_tiles >= 4)

    gamma2 = gamma.reshape(1, D)
    beta2 = beta.reshape(1, D)
    b2 = b.reshape(1, D_out)

    out2 = _prenorm_linear_call(
        x2, gamma2, beta2, w, b2, tile_rows=tr, tile_n=tn,
        sb_w=sb_w, vmem_limit_bytes=budget)
    return out2.reshape(B, S, D_out)


def _reference(x, gamma, beta, w, b):
    xf = x.astype(jnp.float32)
    mean = jnp.mean(xf, axis=-1, keepdims=True)
    var = jnp.mean((xf - mean) ** 2, axis=-1, keepdims=True)
    y = (xf - mean) * jax.lax.rsqrt(var + EPS) * gamma + beta
    return (y @ w.astype(jnp.float32) + b).astype(x.dtype)


if __name__ == "__main__":
    # Small but lane-dense shapes (D, D_out multiples of 128 avoid masked
    # partial stores and use the full MXU lane width).
    B, S, D = 2, 8, 128
    D_out = 128

    key = jax.random.PRNGKey(0)
    kx, kw, kb = jax.random.split(key, 3)

    x = jax.random.normal(kx, (B, S, D), dtype=jnp.float32)

    # LayerNorm params at PyTorch init (gamma=1, beta=0); Linear params random.
    gamma = jnp.ones((D,), dtype=jnp.float32)
    beta = jnp.zeros((D,), dtype=jnp.float32)
    w = jax.random.normal(kw, (D, D_out), dtype=jnp.float32) * (1.0 / jnp.sqrt(D))
    b = jax.random.normal(kb, (D_out,), dtype=jnp.float32) * 0.01

    out = prenorm_linear(x, gamma, beta, w, b)
    jax.block_until_ready(out)

    ref = _reference(x, gamma, beta, w, b)
    assert out.shape == (B, S, D_out)
    assert jnp.allclose(out, ref, atol=1e-3, rtol=1e-3), "mismatch vs reference"

    print("KERNEL_OK")
</pallas_src>

<mosaic_0001>
module attributes {stable_mosaic.version = 11 : i64} {
  func.func @prenorm_linear_kernel(%arg0: i32, %arg1: i32, %arg2: memref<16x128xf32, #tpu.memory_space<vmem>>, %arg3: memref<1x128xf32, #tpu.memory_space<vmem>>, %arg4: memref<1x128xf32, #tpu.memory_space<vmem>>, %arg5: memref<128x128xf32, #tpu.memory_space<vmem>>, %arg6: memref<1x128xf32, #tpu.memory_space<vmem>>, %arg7: memref<16x128xf32, #tpu.memory_space<vmem>>) attributes {dimension_semantics = [#tpu.dimension_semantics<parallel>, #tpu.dimension_semantics<parallel>], iteration_bounds = array<i64: 1, 1>, scalar_prefetch = 0 : i64, scratch_operands = 0 : i64, tpu.core_type = #tpu.core_type<tc>, window_params = [{transform_indices = @transform_0, window_bounds = array<i64: 16, 128>}, {pipeline_mode = #tpu.pipeline_mode<synchronous>, transform_indices = @transform_1, window_bounds = array<i64: 1, 128>}, {pipeline_mode = #tpu.pipeline_mode<synchronous>, transform_indices = @transform_2, window_bounds = array<i64: 1, 128>}, {pipeline_mode = #tpu.pipeline_mode<synchronous>, transform_indices = @transform_3, window_bounds = array<i64: 128, 128>}, {pipeline_mode = #tpu.pipeline_mode<synchronous>, transform_indices = @transform_4, window_bounds = array<i64: 1, 128>}, {transform_indices = @transform_5, window_bounds = array<i64: 16, 128>}]} {
    %c0 = arith.constant 0 : index
    %c0_0 = arith.constant 0 : index
    %0 = vector.load %arg2[%c0, %c0_0] : memref<16x128xf32, #tpu.memory_space<vmem>>, vector<16x128xf32>
    %cst = arith.constant dense<0.000000e+00> : vector<16xf32>
    %1 = vector.multi_reduction <add>, %0, %cst [1] : vector<16x128xf32> to vector<16xf32>
    %2 = vector.shape_cast %1 : vector<16xf32> to vector<16x1xf32>
    %cst_1 = arith.constant 1.280000e+02 : f32
    %3 = vector.broadcast %cst_1 : f32 to vector<16x1xf32>
    %4 = arith.divf %2, %3 : vector<16x1xf32>
    %5 = vector.broadcast %4 : vector<16x1xf32> to vector<16x128xf32>
    %6 = arith.subf %0, %5 : vector<16x128xf32>
    %7 = arith.mulf %6, %6 : vector<16x128xf32>
    %cst_2 = arith.constant dense<0.000000e+00> : vector<16xf32>
    %8 = vector.multi_reduction <add>, %7, %cst_2 [1] : vector<16x128xf32> to vector<16xf32>
    %9 = vector.shape_cast %8 : vector<16xf32> to vector<16x1xf32>
    %cst_3 = arith.constant 1.280000e+02 : f32
    %10 = vector.broadcast %cst_3 : f32 to vector<16x1xf32>
    %11 = arith.divf %9, %10 : vector<16x1xf32>
    %cst_4 = arith.constant 9.99999974E-6 : f32
    %12 = vector.broadcast %cst_4 : f32 to vector<16x1xf32>
    %13 = arith.addf %11, %12 : vector<16x1xf32>
    %14 = math.rsqrt %13 : vector<16x1xf32>
    %c0_5 = arith.constant 0 : index
    %c0_6 = arith.constant 0 : index
    %15 = vector.load %arg3[%c0_5, %c0_6] : memref<1x128xf32, #tpu.memory_space<vmem>>, vector<1x128xf32>
    %16 = vector.broadcast %14 : vector<16x1xf32> to vector<16x128xf32>
    %17 = vector.broadcast %15 : vector<1x128xf32> to vector<16x128xf32>
    %18 = arith.mulf %16, %17 : vector<16x128xf32>
    %19 = arith.mulf %6, %18 : vector<16x128xf32>
    %c0_7 = arith.constant 0 : index
    %c0_8 = arith.constant 0 : index
    %20 = vector.load %arg4[%c0_7, %c0_8] : memref<1x128xf32, #tpu.memory_space<vmem>>, vector<1x128xf32>
    %21 = vector.broadcast %20 : vector<1x128xf32> to vector<16x128xf32>
    %22 = arith.addf %19, %21 : vector<16x128xf32>
    %c0_9 = arith.constant 0 : index
    %c0_10 = arith.constant 0 : index
    %23 = vector.load %arg5[%c0_9, %c0_10] : memref<128x128xf32, #tpu.memory_space<vmem>>, vector<128x128xf32>
    %cst_11 = arith.constant dense<0.000000e+00> : vector<16x128xf32>
    %24 = tpu.matmul %22, %23, %cst_11 {dimension_numbers = #tpu.dot_dimension_numbers<[1], [0], [0], [1], [0, 0, 1, 1], [], []>} : vector<16x128xf32>, vector<128x128xf32>, vector<16x128xf32> -> vector<16x128xf32>
    %c0_12 = arith.constant 0 : index
    %c0_13 = arith.constant 0 : index
    %25 = vector.load %arg6[%c0_12, %c0_13] : memref<1x128xf32, #tpu.memory_space<vmem>>, vector<1x128xf32>
    %26 = vector.broadcast %25 : vector<1x128xf32> to vector<16x128xf32>
    %27 = arith.addf %24, %26 : vector<16x128xf32>
    %c0_14 = arith.constant 0 : index
    %c0_15 = arith.constant 0 : index
    %28 = vector.load %arg7[%c0_14, %c0_15] : memref<16x128xf32, #tpu.memory_space<vmem>>, vector<16x128xf32>
    tpu.vector_store %arg7[%c0_14, %c0_15], %27 {strides = array<i32>} : memref<16x128xf32, #tpu.memory_space<vmem>>, vector<16x128xf32>,
    return
  }
  func.func @transform_0(%arg0: i32, %arg1: i32) -> (i32, i32) {
    %c0_i32 = arith.constant 0 : i32
    %c0_i32_0 = arith.constant 0 : i32
    return %arg1, %c0_i32 : i32, i32
  }
  func.func @transform_1(%arg0: i32, %arg1: i32) -> (i32, i32) {
    %c0_i32 = arith.constant 0 : i32
    %c0_i32_0 = arith.constant 0 : i32
    %c0_i32_1 = arith.constant 0 : i32
    return %c0_i32, %c0_i32_0 : i32, i32
  }
  func.func @transform_2(%arg0: i32, %arg1: i32) -> (i32, i32) {
    %c0_i32 = arith.constant 0 : i32
    %c0_i32_0 = arith.constant 0 : i32
    %c0_i32_1 = arith.constant 0 : i32
    return %c0_i32, %c0_i32_0 : i32, i32
  }
  func.func @transform_3(%arg0: i32, %arg1: i32) -> (i32, i32) {
    %c0_i32 = arith.constant 0 : i32
    %c0_i32_0 = arith.constant 0 : i32
    return %c0_i32, %arg0 : i32, i32
  }
  func.func @transform_4(%arg0: i32, %arg1: i32) -> (i32, i32) {
    %c0_i32 = arith.constant 0 : i32
    %c0_i32_0 = arith.constant 0 : i32
    return %c0_i32, %arg0 : i32, i32
  }
  func.func @transform_5(%arg0: i32, %arg1: i32) -> (i32, i32) {
    %c0_i32 = arith.constant 0 : i32
    return %arg1, %arg0 : i32, i32
  }
}

</mosaic_0001>

<llo_original>
// kernel: _prenorm_linear_call.1
$region0: #{_prenorm_linear_call.1}
  #allocation0 [shape = 'u32[]', space=smem, size = 0x4, offset = 0x4, fixed_abs, tag = 'smem constant byte address 0x4 - core index']
  #allocation1 [shape = 'u32[144,128]{1,0:T(1,128)}', space=vmem, size = 0x12000, scoped, tag = 'internal scratch']
  %s0 = inlined_call_operand.hbm [shape: f32[16,128], index: 0, kind: input, shape index: {}]
  %s1 = inlined_call_operand.vmem [shape: f32[1,128], index: 1, kind: input, shape index: {}]
  %s2 = inlined_call_operand.vmem [shape: f32[1,128], index: 2, kind: input, shape index: {}]
  %s3 = inlined_call_operand.hbm [shape: f32[128,128], index: 3, kind: input, shape index: {}]
  %s4 = inlined_call_operand.vmem [shape: f32[1,128], index: 4, kind: input, shape index: {}]
  %s5 = inlined_call_operand.hbm [shape: f32[16,128], index: 5, kind: output, shape index: {}]
  %s6 = sld [smem:[#allocation0]]
  $region38: #{_prenorm_linear_call.1} parent=0
    _
  %s8 = ssub.s32 1, %s6
  %s9 = scalar_select 0, %s8, %s6
  $region1: #{_prenorm_linear_call.1} parent=0
    #allocation2 [shape = 'u8[8192]{0}', space=vmem, size = 0x2000, scoped, tag = 'input window, operand 0, single buffered']
    #allocation3 [shape = 's32[1]{0}', space=sflag, size = 0x4, scoped, tag = 'scoped memory for _prenorm_linear_call.1']
    #allocation4 [shape = 's32[1]{0}', space=sflag, size = 0x4, scoped, tag = 'scoped memory for _prenorm_linear_call.1']
    #allocation5 [shape = 'u8[65536]{0}', space=vmem, size = 0x10000, scoped, tag = 'input window, operand 3, single buffered']
    #allocation6 [shape = 's32[1]{0}', space=sflag, size = 0x4, scoped, tag = 'scoped memory for _prenorm_linear_call.1']
    #allocation7 [shape = 'u8[8192]{0}', space=vmem, size = 0x2000, scoped, tag = 'output window, operand 0, single buffered']
    %10 = vsyncpa [#allocation3], 0
    %11 = vsyncpa [#allocation6], 0
    %12 = vsyncpa [#allocation4], 0
    // Predicated region
    $region2: #{_prenorm_linear_call.1} parent=1 // pred_check
      _
    $region3: #{_prenorm_linear_call.1} parent=1 // pred_check_branch
      %14 = sbr.rel (0) target = $region5
    $region4: #{_prenorm_linear_call.1} parent=1 // pred_region
      %s16 = ssub.s32 256, 256
      %17 = vsyncadd [#allocation3], %s16
      %s18 = sshll.u32 [#allocation2], 4
      %s19 = int_to_ptr.vmem [resolvable:$true] %s18
      %24 = dma.hbm_to_vmem [thread:$0]  %s0, 256, %s19, [#allocation3], 128, 128, 8
    $region5: #{_prenorm_linear_call.1} parent=1 // pred_fallthru
      _
    // Predicated region
    $region6: #{_prenorm_linear_call.1} parent=1 // pred_check
      _
    $region7: #{_prenorm_linear_call.1} parent=1 // pred_check_branch
      %26 = sbr.rel (0) target = $region9
    $region8: #{_prenorm_linear_call.1} parent=1 // pred_region
      _
    $region9: #{_prenorm_linear_call.1} parent=1 // pred_fallthru
      _
    // Predicated region
    $region10: #{_prenorm_linear_call.1} parent=1 // pred_check
      _
    $region11: #{_prenorm_linear_call.1} parent=1 // pred_check_branch
      %28 = sbr.rel (0) target = $region13
    $region12: #{_prenorm_linear_call.1} parent=1 // pred_region
      _
    $region13: #{_prenorm_linear_call.1} parent=1 // pred_fallthru
      _
    // Predicated region
    $region14: #{_prenorm_linear_call.1} parent=1 // pred_check
      _
    $region15: #{_prenorm_linear_call.1} parent=1 // pred_check_branch
      %30 = sbr.rel (0) target = $region17
    $region16: #{_prenorm_linear_call.1} parent=1 // pred_region
      %s32 = ssub.s32 2048, 2048
      %33 = vsyncadd [#allocation6], %s32
      %s34 = sshll.u32 [#allocation5], 4
      %s35 = int_to_ptr.vmem [resolvable:$true] %s34
      %40 = dma.hbm_to_vmem [thread:$0]  %s3, 2048, %s35, [#allocation6], 128, 128, 8
    $region17: #{_prenorm_linear_call.1} parent=1 // pred_fallthru
      _
    // Predicated region
    $region18: #{_prenorm_linear_call.1} parent=1 // pred_check
      _
    $region19: #{_prenorm_linear_call.1} parent=1 // pred_check_branch
      %42 = sbr.rel (0) target = $region21
    $region20: #{_prenorm_linear_call.1} parent=1 // pred_region
      _
    $region21: #{_prenorm_linear_call.1} parent=1 // pred_fallthru
      _
    // Predicated region
    $region22: #{_prenorm_linear_call.1} parent=1 // pred_check
      _
    $region23: #{_prenorm_linear_call.1} parent=1 // pred_check_branch
      %44 = sbr.rel (0) target = $region25
    $region24: #{_prenorm_linear_call.1} parent=1 // pred_region
      %45 = dma.done [#allocation3], 256
    $region25: #{_prenorm_linear_call.1} parent=1 // pred_fallthru
      _
    // Predicated region
    $region26: #{_prenorm_linear_call.1} parent=1 // pred_check
      _
    $region27: #{_prenorm_linear_call.1} parent=1 // pred_check_branch
      %47 = sbr.rel (0) target = $region29
    $region28: #{_prenorm_linear_call.1} parent=1 // pred_region
      %48 = dma.done [#allocation6], 2048
    $region29: #{_prenorm_linear_call.1} parent=1 // pred_fallthru
      _
    %v49 = vld [vmem:[#allocation2] sm:$0xff]
    %v50 = vld [vmem:[#allocation2 + $0x8] sm:$0xff]
    %51 = vadd.xlane.f32.xlu0 %v49
    %v52 = vpop.xlane.xlu0 %51
    %53 = vadd.xlane.f32.xlu0 %v50
    %v54 = vpop.xlane.xlu0 %53
    %v55 = vrcp.pop 128.0
    %v56 = vmul.f32 %v52, %v55
    %v57 = vmul.f32 %v54, %v55
    %v58 = vsub.f32 %v49, %v56
    %v59 = vsub.f32 %v50, %v57
    %v60 = vmul.f32 %v58, %v58
    %v61 = vmul.f32 %v59, %v59
    %62 = vadd.xlane.f32.xlu0 %v60
    %v63 = vpop.xlane.xlu0 %62
    %64 = vadd.xlane.f32.xlu0 %v61
    %v65 = vpop.xlane.xlu0 %64
    %v66 = vmul.f32 %v63, %v55
    %v67 = vmul.f32 %v65, %v55
    %v68 = vadd.f32 %v66, 1e-05
    %v69 = vadd.f32 %v67, 1e-05
    %v70 = vrsqrt.pop %v68
    %v71 = vrsqrt.pop %v69
    %v72 = vld [vmem:[%s1] sm:$0x1]
    %v74 = vlaneseq
    %v75 = vshrl.u32 %v74, 7
    %v76 = vsub.s32 0, %v75
    %v77 = vrot.slane %v72, %v76
    %v79 = vmul.f32 %v70, %v77
    %v80 = vmul.f32 %v71, %v77
    %v81 = vmul.f32 %v58, %v79
    %v82 = vmul.f32 %v59, %v80
    %v83 = vld [vmem:[%s2] sm:$0x1]
    %v85 = vlaneseq
    %v86 = vshrl.u32 %v85, 7
    %v87 = vsub.s32 0, %v86
    %v88 = vrot.slane %v83, %v87
    %v90 = vadd.f32 %v81, %v88
    %v91 = vadd.f32 %v82, %v88
    %v92 = vld [vmem:[#allocation5] sm:$0xff]
    %v93 = vld [vmem:[#allocation5 + $0x8] sm:$0xff]
    %v94 = vld [vmem:[#allocation5 + $0x10] sm:$0xff]
    %v95 = vld [vmem:[#allocation5 + $0x18] sm:$0xff]
    %v96 = vld [vmem:[#allocation5 + $0x20] sm:$0xff]
    %v97 = vld [vmem:[#allocation5 + $0x28] sm:$0xff]
    %v98 = vld [vmem:[#allocation5 + $0x30] sm:$0xff]
    %v99 = vld [vmem:[#allocation5 + $0x38] sm:$0xff]
    %v100 = vld [vmem:[#allocation5 + $0x40] sm:$0xff]
    %v101 = vld [vmem:[#allocation5 + $0x48] sm:$0xff]
    %v102 = vld [vmem:[#allocation5 + $0x50] sm:$0xff]
    %v103 = vld [vmem:[#allocation5 + $0x58] sm:$0xff]
    %v104 = vld [vmem:[#allocation5 + $0x60] sm:$0xff]
    %v105 = vld [vmem:[#allocation5 + $0x68] sm:$0xff]
    %v106 = vld [vmem:[#allocation5 + $0x70] sm:$0xff]
    %v107 = vld [vmem:[#allocation5 + $0x78] sm:$0xff]
    %v108 = vld [vmem:[%s4] sm:$0x1]
    %v110 = vlaneseq
    %v111 = vshrl.u32 %v110, 7
    %v112 = vsub.s32 0, %v111
    %v113 = vrot.slane %v108, %v112
    %115 = vmatprep.subr.mxu0 0.0
    %116 = vmatpush1.msra.mxu0 %v92
    %117 = vmatprep.subr.mxu0 0.0
    %118 = vmatpush1.msra.mxu0 %v93
    %119 = vmatprep.subr.mxu0 0.0
    %120 = vmatpush1.msra.mxu0 %v94
    %121 = vmatprep.subr.mxu0 0.0
    %122 = vmatpush1.msra.mxu0 %v95
    %123 = vmatprep.subr.mxu0 0.0
    %124 = vmatpush1.msra.mxu0 %v96
    %125 = vmatprep.subr.mxu0 0.0
    %126 = vmatpush1.msra.mxu0 %v97
    %127 = vmatprep.subr.mxu0 0.0
    %128 = vmatpush1.msra.mxu0 %v98
    %129 = vmatprep.subr.mxu0 0.0
    %130 = vmatpush1.msra.mxu0 %v99
    %131 = vmatprep.subr.mxu0 0.0
    %132 = vmatpush1.msra.mxu0 %v100
    %133 = vmatprep.subr.mxu0 0.0
    %134 = vmatpush1.msra.mxu0 %v101
    %135 = vmatprep.subr.mxu0 0.0
    %136 = vmatpush1.msra.mxu0 %v102
    %137 = vmatprep.subr.mxu0 0.0
    %138 = vmatpush1.msra.mxu0 %v103
    %139 = vmatprep.subr.mxu0 0.0
    %140 = vmatpush1.msra.mxu0 %v104
    %141 = vmatprep.subr.mxu0 0.0
    %142 = vmatpush1.msra.mxu0 %v105
    %143 = vmatprep.subr.mxu0 0.0
    %144 = vmatpush1.msra.mxu0 %v106
    %145 = vmatprep.subr.mxu0 0.0
    %146 = vmatpush1.msra.mxu0 %v107
    %147 = vmatprep.subr.mxu0 0.0
    %148 = vmatpush1.msra.mxu0 0.0
    %149 = vmatprep.subr.mxu0 0.0
    %150 = vmatpush1.msra.mxu0 0.0
    %151 = vmatprep.subr.mxu0 0.0
    %152 = vmatpush1.msra.mxu0 0.0
    %153 = vmatprep.subr.mxu0 0.0
    %154 = vmatpush1.msra.mxu0 0.0
    %155 = vmatprep.subr.mxu0 0.0
    %156 = vmatpush1.msra.mxu0 0.0
    %157 = vmatprep.subr.mxu0 0.0
    %158 = vmatpush1.msra.mxu0 0.0
    %159 = vmatprep.subr.mxu0 0.0
    %160 = vmatpush1.msra.mxu0 0.0
    %161 = vmatprep.subr.mxu0 0.0
    %162 = vmatpush1.msra.mxu0 0.0
    %163 = vmatprep.subr.mxu0 0.0
    %164 = vmatpush1.msra.mxu0 0.0
    %165 = vmatprep.subr.mxu0 0.0
    %166 = vmatpush1.msra.mxu0 0.0
    %167 = vmatprep.subr.mxu0 0.0
    %168 = vmatpush1.msra.mxu0 0.0
    %169 = vmatprep.subr.mxu0 0.0
    %170 = vmatpush1.msra.mxu0 0.0
    %171 = vmatprep.subr.mxu0 0.0
    %172 = vmatpush1.msra.mxu0 0.0
    %173 = vmatprep.subr.mxu0 0.0
    %174 = vmatpush1.msra.mxu0 0.0
    %175 = vmatprep.subr.mxu0 0.0
    %176 = vmatpush1.msra.mxu0 0.0
    %177 = vmatprep.subr.mxu0 0.0
    %178 = vmatpush1.msra.mxu0 0.0
    %179 = vmatprep.mubr.f32.mxu0 0.0
    %180 = vmatmul.mubr.f32.gmra.mrb[0].mxu0 %v90
    %v181 = vpop.f32.mrb[0].mxu0
    %v182 = vadd.f32 %v113, %v181
    %v183 = vpop.f32.mrb[0].mxu0
    %184 = vmatprep.mubr.f32.mxu0 0.0
    %185 = vmatmul.mubr.f32.gmra.mrb[0].mxu0 %v91
    %v186 = vpop.f32.mrb[0].mxu0
    %v187 = vadd.f32 %v113, %v186
    %v188 = vpop.f32.mrb[0].mxu0
    %189 = vdwg.mxu0
    %190 = vst [vmem:[#allocation7] sm:$0xff] %v182
    %191 = vst [vmem:[#allocation7 + $0x8] sm:$0xff] %v187
    // Predicated region
    $region30: #{_prenorm_linear_call.1} parent=1 // pred_check
      _
    $region31: #{_prenorm_linear_call.1} parent=1 // pred_check_branch
      %193 = sbr.rel (0) target = $region33
    $region32: #{_prenorm_linear_call.1} parent=1 // pred_region
      %s195 = ssub.s32 256, 256
      %196 = vsyncadd [#allocation4], %s195
      %s197 = sshll.u32 [#allocation7], 4
      %s198 = int_to_ptr.vmem [resolvable:$true] %s197
      %203 = dma.vmem_to_hbm [thread:$0]  %s198, 256, %s5, [#allocation4], 128, 128, 8
    $region33: #{_prenorm_linear_call.1} parent=1 // pred_fallthru
      _
    // Predicated region
    $region34: #{_prenorm_linear_call.1} parent=1 // pred_check
      _
    $region35: #{_prenorm_linear_call.1} parent=1 // pred_check_branch
      %205 = sbr.rel (0) target = $region37
    $region36: #{_prenorm_linear_call.1} parent=1 // pred_region
      %206 = dma.done [#allocation4], 256
    $region37: #{_prenorm_linear_call.1} parent=1 // pred_fallthru
      _
    %207 = vsyncpa [#allocation3], 1
    %208 = vsyncpa [#allocation6], 1
    %209 = vsyncpa [#allocation4], 1

</llo_original>
